<compile_context>
chip_gen: v6e
topology: v6e:2x2x1
jax: 0.10.0
libtpu: 0.0.40
codegen_flags: <defaults>
</compile_context>

<pallas_src>
import jax
import jax.numpy as jnp
from jax.experimental import pallas as pl
from jax.experimental.pallas import tpu as pltpu


LANE = 128
SUBLANE = 8
MAX_WIDTH = 4096               # lane-dense slab width (multiple of LANE)
MIN_PALLAS_BYTES = 1 << 18     # below ~256 KiB plain XLA is strictly faster


def _gamma_scale_kernel(gamma_ref, w_ref, o_ref):
    # gamma_ref: scalar-prefetch SMEM f32 of shape (1,); w_ref / o_ref: (tm, W)
    # VMEM tiles.  Multiply in f32 (matches PyTorch's promotion of a bf16 tensor
    # by the f32 Parameter), cast on store.  HBM-bound -> the convert+mul is free.
    o_ref[...] = (w_ref[...].astype(jnp.float32) * gamma_ref[0]).astype(o_ref.dtype)


def _hw_plan():
    """Per-generation sizing: (target_tile_bytes, vmem_limit_bytes, prefer_grid4).

    128 MiB-VMEM parts (v5e/v6e, single TC): bigger tiles, no need to force >=4
    steps.  v7x (64 MiB VMEM, 2 TCs) or unknown: capped tiles, prefer >=4 steps
    so both TCs get pipelined work.
    """
    vmem = None
    try:
        info = pltpu.get_tpu_info()
        for name in ("vmem_capacity_bytes", "vmem_bytes", "vmem_size_bytes"):
            vmem = getattr(info, name, None)
            if vmem is not None:
                break
    except Exception:
        vmem = None
    if vmem is not None and vmem >= (96 << 20):
        return 8 << 20, 72 << 20, False     # v5e / v6e
    return 4 << 20, 40 << 20, True          # v7x / unknown (conservative)


def _plan_layout(n, itemsize, target_tile_bytes, prefer_grid4):
    """Plan a lane-dense (M, W) slab tiled as (tm, W) blocks.

    Returns (width, M, tm) with tm dividing M exactly (no ragged edge blocks),
    or None if the Pallas path should be skipped in favour of plain XLA.
    """
    # Packed-sublane quantum: 8 for f32, 16 for bf16, 32 for int8/fp8.
    sub = SUBLANE * max(1, 4 // itemsize)

    # Widest multiple of LANE (<= MAX_WIDTH) that divides n exactly -> no padding.
    width = 0
    w_cand = min(MAX_WIDTH, (n // LANE) * LANE)
    while w_cand >= LANE:
        if n % w_cand == 0:
            width = w_cand
            break
        w_cand -= LANE
    if width == 0:
        return None  # awkward size: XLA's fused multiply is already 1R+1W
    M = n // width

    # Largest allowed tile height (multiple of the packed-sublane quantum).
    max_tm = max(sub, (target_tile_bytes // (itemsize * width) // sub) * sub)

    # Clean (divisor) tilings only: tm multiple of sub, divides M, <= max_tm.
    # Category 0: even grid >= 2 (shards evenly across 2 TCs), 1: odd grid >= 2,
    # 2: grid == 1.  Within a category prefer the largest tm.
    best = None
    t = min(max_tm, (M // sub) * sub)
    while t >= sub:
        if M % t == 0:
            g = M // t
            cat = 0 if (g >= 2 and g % 2 == 0) else (1 if g >= 2 else 2)
            if best is None or cat < best[0] or (cat == best[0] and t > best[1]):
                best = (cat, t)
        t -= sub

    if best is not None and best[0] <= 1:
        tm = best[1]
        steps = M // tm
        # Guard pathological divisor structure (huge step counts of tiny tiles):
        # XLA streams those better than a grid dominated by per-step overhead.
        needed = -(-(M * width * itemsize) // target_tile_bytes)
        if steps > 8 * max(needed, 2):
            return None
        # "Ideally >= 4 steps" on multi-TC parts: a 2-step grid gives each TC a
        # single step (no in/out DMA overlap); split to 4 if blocks stay >= 1 MiB.
        if (prefer_grid4 and steps == 2 and tm % (2 * sub) == 0
                and (tm // 2) * width * itemsize >= (1 << 20)):
            tm //= 2
        return width, M, tm

    # No sub-aligned split of M exists (e.g. odd M): a single full-slab block
    # (block_shape == array shape is always layout-legal) if it fits VMEM,
    # otherwise leave it to XLA.
    if M * width * itemsize <= 2 * target_tile_bytes:
        return width, M, M
    return None


def gamma_scaling(w: jax.Array, gamma: jax.Array, *,
                  min_pallas_bytes: int = MIN_PALLAS_BYTES) -> jax.Array:
    """Pallas equivalent of _GammaScaling.forward: w * gamma (gamma shape (1,))."""
    assert jnp.issubdtype(w.dtype, jnp.floating), "gamma scaling expects float weights"
    orig_shape = w.shape
    orig_dtype = w.dtype
    gamma_f32 = jnp.asarray(gamma, dtype=jnp.float32).reshape(1)

    n = w.size
    itemsize = jnp.dtype(orig_dtype).itemsize

    def _xla():
        # Fused elementwise multiply; used for tiny or layout-awkward sizes.
        return (w.astype(jnp.float32) * gamma_f32[0]).astype(orig_dtype)

    if n == 0 or n * itemsize < min_pallas_bytes:
        return _xla()

    target_tile_bytes, vmem_limit, prefer_grid4 = _hw_plan()
    plan = _plan_layout(n, itemsize, target_tile_bytes, prefer_grid4)
    if plan is None:
        return _xla()
    width, M, tm = plan

    w2d = w.reshape(M, width)
    grid = M // tm  # tm always divides M by construction (no ragged edge blocks)

    out2d = pl.pallas_call(
        _gamma_scale_kernel,
        out_shape=jax.ShapeDtypeStruct((M, width), orig_dtype),
        grid_spec=pltpu.PrefetchScalarGridSpec(
            num_scalar_prefetch=1,                 # gamma -> loop-invariant SMEM
            grid=(grid,),
            in_specs=[
                pl.BlockSpec((tm, width), lambda i, gamma_ref: (i, 0)),
            ],
            out_specs=pl.BlockSpec((tm, width), lambda i, gamma_ref: (i, 0)),
        ),
        compiler_params=pltpu.CompilerParams(
            dimension_semantics=("parallel",),     # megacore-shardable on v7x
            vmem_limit_bytes=vmem_limit,
        ),
        cost_estimate=pl.CostEstimate(
            flops=n, transcendentals=0, bytes_accessed=2 * n * itemsize + 4),
    )(gamma_f32, w2d)

    return out2d.reshape(orig_shape)


if __name__ == "__main__":
    key = jax.random.PRNGKey(0)
    k1, k2, k3, k4, k5 = jax.random.split(key, 5)

    gamma_one = jnp.ones((1,), dtype=jnp.float32)      # nn.Parameter(torch.ones(1))
    gamma_val = jnp.array([1.75], dtype=jnp.float32)   # non-trivial value

    # 1) Module-sized example (NCHW-shaped weight), forced through the Pallas
    #    path so the kernel itself is exercised at this size.
    w_small = jax.random.normal(k1, (2, 4, 16, 16), dtype=jnp.float32)
    out_small = gamma_scaling(w_small, gamma_val, min_pallas_bytes=0)
    jax.block_until_ready(out_small)
    assert out_small.shape == w_small.shape and out_small.dtype == w_small.dtype
    assert jnp.allclose(out_small, w_small * 1.75), "small f32 mismatch"

    out_id = gamma_scaling(w_small, gamma_one, min_pallas_bytes=0)
    jax.block_until_ready(out_id)
    assert jnp.allclose(out_id, w_small), "identity gamma mismatch"

    # Default (tiny-tensor XLA short-circuit) agrees as well.
    assert jnp.allclose(gamma_scaling(w_small, gamma_val), w_small * 1.75)

    # 2) Larger f32 weight -> lane-dense 4096-wide slab, multi-step even grid,
    #    also exercised under jit.
    w_big = jax.random.normal(k2, (1024, 1024), dtype=jnp.float32)
    scaled = jax.jit(lambda w, g: gamma_scaling(w, g, min_pallas_bytes=0))
    out_big = scaled(w_big, gamma_val)
    jax.block_until_ready(out_big)
    assert jnp.allclose(out_big, w_big * 1.75), "large f32 mismatch"

    # 3) bf16 weight: packed-sublane-aligned tiles (tm multiple of 16), f32 math.
    w_bf16 = jax.random.normal(k3, (512, 512), dtype=jnp.float32).astype(jnp.bfloat16)
    out_bf16 = gamma_scaling(w_bf16, gamma_val, min_pallas_bytes=0)
    jax.block_until_ready(out_bf16)
    ref_bf16 = (w_bf16.astype(jnp.float32) * 1.75).astype(jnp.bfloat16)
    assert out_bf16.dtype == jnp.bfloat16
    assert jnp.allclose(out_bf16.astype(jnp.float32), ref_bf16.astype(jnp.float32),
                        rtol=1e-2, atol=1e-2), "bf16 mismatch"

    # 4) bf16 with odd row count (M=1001: no sublane-aligned divisor) -> single
    #    full-slab block; checks Mosaic accepts the non-8-multiple full block.
    w_odd = jax.random.normal(k4, (1001, 4096), dtype=jnp.float32).astype(jnp.bfloat16)
    out_odd = gamma_scaling(w_odd, gamma_val, min_pallas_bytes=0)
    jax.block_until_ready(out_odd)
    ref_odd = (w_odd.astype(jnp.float32) * 1.75).astype(jnp.bfloat16)
    assert jnp.allclose(out_odd.astype(jnp.float32), ref_odd.astype(jnp.float32),
                        rtol=1e-2, atol=1e-2), "odd-M bf16 mismatch"

    # 5) Awkward element count (no multiple-of-128 width divides it) -> plain XLA
    #    path (no pad/slice copies).
    w_awk = jax.random.normal(k5, (7, 9, 13), dtype=jnp.float32)
    out_awk = gamma_scaling(w_awk, gamma_val, min_pallas_bytes=0)
    jax.block_until_ready(out_awk)
    assert jnp.allclose(out_awk, w_awk * 1.75), "awkward-size mismatch"

    print("KERNEL_OK")
</pallas_src>

<mosaic_0001>
module attributes {stable_mosaic.version = 11 : i64} {
  func.func @_gamma_scale_kernel(%arg0: i32, %arg1: memref<1xf32, #tpu.memory_space<smem>>, %arg2: memref<1x2048xf32, #tpu.memory_space<vmem>>, %arg3: memref<1x2048xf32, #tpu.memory_space<vmem>>) attributes {dimension_semantics = [#tpu.dimension_semantics<parallel>], iteration_bounds = array<i64: 1>, scalar_prefetch = 1 : i64, scratch_operands = 0 : i64, tpu.core_type = #tpu.core_type<tc>, window_params = [{transform_indices = @transform_0, window_bounds = array<i64: 1, 2048>}, {transform_indices = @transform_1, window_bounds = array<i64: 1, 2048>}]} {
    %c0 = arith.constant 0 : index
    %c0_0 = arith.constant 0 : index
    %0 = vector.load %arg2[%c0, %c0_0] : memref<1x2048xf32, #tpu.memory_space<vmem>>, vector<1x2048xf32>
    %c0_1 = arith.constant 0 : index
    %1 = memref.load %arg1[%c0_1] : memref<1xf32, #tpu.memory_space<smem>>
    %2 = vector.broadcast %1 : f32 to vector<1x2048xf32>
    %3 = arith.mulf %0, %2 : vector<1x2048xf32>
    %c0_2 = arith.constant 0 : index
    %c0_3 = arith.constant 0 : index
    %4 = vector.load %arg3[%c0_2, %c0_3] : memref<1x2048xf32, #tpu.memory_space<vmem>>, vector<1x2048xf32>
    tpu.vector_store %arg3[%c0_2, %c0_3], %3 {strides = array<i32>} : memref<1x2048xf32, #tpu.memory_space<vmem>>, vector<1x2048xf32>,
    return
  }
  func.func @transform_0(%arg0: i32, %arg1: memref<1xf32, #tpu.memory_space<smem>>) -> (i32, i32) {
    %c0_i32 = arith.constant 0 : i32
    %c0_i32_0 = arith.constant 0 : i32
    return %arg0, %c0_i32 : i32, i32
  }
  func.func @transform_1(%arg0: i32, %arg1: memref<1xf32, #tpu.memory_space<smem>>) -> (i32, i32) {
    %c0_i32 = arith.constant 0 : i32
    %c0_i32_0 = arith.constant 0 : i32
    return %arg0, %c0_i32 : i32, i32
  }
}

</mosaic_0001>

<llo_original>
// kernel: tpu_custom_call.1
$region0: #{tpu_custom_call.1}
  #allocation0 [shape = 'u32[]', space=smem, size = 0x4, offset = 0x4, fixed_abs, tag = 'smem constant byte address 0x4 - core index']
  #allocation1 [shape = 'u32[144,128]{1,0:T(1,128)}', space=vmem, size = 0x12000, scoped, tag = 'internal scratch']
  #allocation2 [shape = 's32[1]{0}', space=sflag, size = 0x4, scoped, tag = 'scoped memory for tpu_custom_call.1']
  #allocation3 [shape = 'f32[1]{0:T(128)S(6)}', space=smem, size = 0x200, scoped, tag = 'prefetched SMEM operand 0']
  %s0 = inlined_call_operand.<no memory space> [shape: f32[1], index: 0, kind: input, shape index: {}]
  %s1 = inlined_call_operand.hbm [shape: f32[1,2048], index: 1, kind: input, shape index: {}]
  %s2 = inlined_call_operand.hbm [shape: f32[1,2048], index: 2, kind: output, shape index: {}]
  %s3 = sld [smem:[#allocation0]]
  $region18: #{tpu_custom_call.1} parent=0
    _
  %s5 = ssub.s32 1, %s3
  %s6 = scalar_select 0, %s5, %s3
  %7 = sst [smem:[#allocation3]] %s0
  $region1: #{tpu_custom_call.1} parent=0
    #allocation4 [shape = 'u8[8192]{0}', space=vmem, size = 0x2000, scoped, tag = 'input window, operand 1, single buffered']
    #allocation5 [shape = 's32[1]{0}', space=sflag, size = 0x4, scoped, tag = 'scoped memory for tpu_custom_call.1']
    #allocation6 [shape = 's32[1]{0}', space=sflag, size = 0x4, scoped, tag = 'scoped memory for tpu_custom_call.1']
    #allocation7 [shape = 'u8[8192]{0}', space=vmem, size = 0x2000, scoped, tag = 'output window, operand 0, single buffered']
    %8 = vsyncpa [#allocation5], 0
    %9 = vsyncpa [#allocation6], 0
    // Predicated region
    $region2: #{tpu_custom_call.1} parent=1 // pred_check
      _
    $region3: #{tpu_custom_call.1} parent=1 // pred_check_branch
      %11 = sbr.rel (0) target = $region5
    $region4: #{tpu_custom_call.1} parent=1 // pred_region
      %s13 = ssub.s32 256, 256
      %14 = vsyncadd [#allocation5], %s13
      %s16 = sshll.u32 [#allocation4], 4
      %s17 = int_to_ptr.vmem [resolvable:$true] %s16
      %19 = dma.hbm_to_vmem [thread:$0]  %s1, 256, %s17, [#allocation5]
    $region5: #{tpu_custom_call.1} parent=1 // pred_fallthru
      _
    // Predicated region
    $region6: #{tpu_custom_call.1} parent=1 // pred_check
      _
    $region7: #{tpu_custom_call.1} parent=1 // pred_check_branch
      %21 = sbr.rel (0) target = $region9
    $region8: #{tpu_custom_call.1} parent=1 // pred_region
      %22 = dma.done [#allocation5], 256
    $region9: #{tpu_custom_call.1} parent=1 // pred_fallthru
      _
    %v23 = vld [vmem:[#allocation4] sm:$0xff]
    %v24 = vld [vmem:[#allocation4 + $0x8] sm:$0xff]
    %s25 = sld [smem:[#allocation3]]
    %v26 = vstv %s25
    %v27 = vmul.f32 %v23, %v26
    %v28 = vmul.f32 %v24, %v26
    %29 = vst [vmem:[#allocation7] sm:$0xff] %v27
    %30 = vst [vmem:[#allocation7 + $0x8] sm:$0xff] %v28
    // Predicated region
    $region10: #{tpu_custom_call.1} parent=1 // pred_check
      _
    $region11: #{tpu_custom_call.1} parent=1 // pred_check_branch
      %32 = sbr.rel (0) target = $region13
    $region12: #{tpu_custom_call.1} parent=1 // pred_region
      %s34 = ssub.s32 256, 256
      %35 = vsyncadd [#allocation6], %s34
      %s37 = sshll.u32 [#allocation7], 4
      %s38 = int_to_ptr.vmem [resolvable:$true] %s37
      %40 = dma.vmem_to_hbm [thread:$0]  %s38, 256, %s2, [#allocation6]
    $region13: #{tpu_custom_call.1} parent=1 // pred_fallthru
      _
    // Predicated region
    $region14: #{tpu_custom_call.1} parent=1 // pred_check
      _
    $region15: #{tpu_custom_call.1} parent=1 // pred_check_branch
      %42 = sbr.rel (0) target = $region17
    $region16: #{tpu_custom_call.1} parent=1 // pred_region
      %43 = dma.done [#allocation6], 256
    $region17: #{tpu_custom_call.1} parent=1 // pred_fallthru
      _
    %44 = vsyncpa [#allocation5], 1
    %45 = vsyncpa [#allocation6], 1

</llo_original>
